<compile_context>
chip_gen: v6e
topology: v6e:2x2x1
jax: 0.10.0
libtpu: 0.0.40
codegen_flags: <defaults>
</compile_context>

<pallas_src>
import functools

import jax
import jax.numpy as jnp
from jax import lax
from jax.experimental import pallas as pl
from jax.experimental.pallas import tpu as pltpu


def _qnet_kernel(x_ref, w1_ref, b1_ref, w2_ref, b2_ref, o_ref):
    """out = relu(x @ W1^T + b1) @ W2^T + b2, all in f32.

    Weights are in PyTorch (out_features, in_features) layout; the
    contraction is expressed directly with dot_general (contract last dim of
    x with last dim of W), so no transpose is needed anywhere.
    """
    x = x_ref[...]
    h = lax.dot_general(x, w1_ref[...], (((1,), (1,)), ((), ())),
                        preferred_element_type=jnp.float32)
    h = jnp.maximum(h + b1_ref[...], 0.0)          # (B, H) + (1, H)
    y = lax.dot_general(h, w2_ref[...], (((1,), (1,)), ((), ())),
                        preferred_element_type=jnp.float32)
    o_ref[...] = (y + b2_ref[...]).astype(o_ref.dtype)   # (B, O) + (1, O)


_SUBLANE = 8          # f32 sublane granularity (pad tiny batches to this)
_BATCH_TILE = 1024    # batch tile for the large-batch (training) path


@jax.jit
def linear_qnet_forward(x, w1, b1, w2, b2):
    """Fused 2-layer MLP forward pass.

    x : (B, input_size)          float32
    w1: (hidden, input_size)     PyTorch layout (no transpose needed)
    b1: (hidden,)
    w2: (output, hidden)         PyTorch layout
    b2: (output,)
    returns (B, output) float32
    """
    B, in_size = x.shape
    hidden = w1.shape[0]
    out_size = w2.shape[0]

    # Pad the batch to the native 8-row sublane granularity so stores are not
    # masked partial stores; sliced back off at the end.
    b_pad = ((B + _SUBLANE - 1) // _SUBLANE) * _SUBLANE
    if b_pad != B:
        x = jnp.pad(x, ((0, b_pad - B), (0, 0)))

    # Biases as (1, N) rows — metadata-only reshape, broadcast inside kernel.
    b1_r = b1.reshape(1, hidden)
    b2_r = b2.reshape(1, out_size)

    if b_pad <= _BATCH_TILE:
        # Small batch: single block, no grid, no pipelining overhead.
        out = pl.pallas_call(
            _qnet_kernel,
            out_shape=jax.ShapeDtypeStruct((b_pad, out_size), x.dtype),
            in_specs=[pl.BlockSpec(memory_space=pltpu.MemorySpace.VMEM)] * 5,
            out_specs=pl.BlockSpec(memory_space=pltpu.MemorySpace.VMEM),
        )(x, w1, b1_r, w2, b2_r)
    else:
        # Large batch (training / replay buffer): tile the batch axis.
        # Weights/biases use a constant index_map so they stay VMEM-resident
        # and are DMA'd once; batch axis is "parallel" for megacore (v7x).
        tb = _BATCH_TILE
        b_tiled = ((b_pad + tb - 1) // tb) * tb
        if b_tiled != b_pad:
            x = jnp.pad(x, ((0, b_tiled - b_pad), (0, 0)))
        out = pl.pallas_call(
            _qnet_kernel,
            out_shape=jax.ShapeDtypeStruct((b_tiled, out_size), x.dtype),
            grid=(b_tiled // tb,),
            in_specs=[
                pl.BlockSpec((tb, in_size), lambda i: (i, 0)),
                pl.BlockSpec((hidden, in_size), lambda i: (0, 0)),
                pl.BlockSpec((1, hidden), lambda i: (0, 0)),
                pl.BlockSpec((out_size, hidden), lambda i: (0, 0)),
                pl.BlockSpec((1, out_size), lambda i: (0, 0)),
            ],
            out_specs=pl.BlockSpec((tb, out_size), lambda i: (i, 0)),
            compiler_params=pltpu.CompilerParams(
                dimension_semantics=("parallel",)),
        )(x, w1, b1_r, w2, b2_r)

    return out[:B]


def init_linear_kaiming_uniform(key, out_features, in_features):
    """Matches the module's initialize_weights():
    nn.init.kaiming_uniform_(w, nonlinearity='relu') -> bound = sqrt(6/fan_in),
    nn.init.zeros_(bias)."""
    bound = jnp.sqrt(6.0 / in_features)
    w = jax.random.uniform(key, (out_features, in_features),
                           minval=-bound, maxval=bound, dtype=jnp.float32)
    b = jnp.zeros((out_features,), dtype=jnp.float32)
    return w, b


def _reference(x, w1, b1, w2, b2):
    return jnp.maximum(x @ w1.T + b1, 0.0) @ w2.T + b2


if __name__ == "__main__":
    # Shapes consistent with the classic snake agent: 11 -> 32 -> 3.
    input_size, hidden_size, output_size = 11, 32, 3
    batch = 4

    key = jax.random.PRNGKey(0)
    k_x, k_w1, k_w2, k_big = jax.random.split(key, 4)

    w1, b1 = init_linear_kaiming_uniform(k_w1, hidden_size, input_size)
    w2, b2 = init_linear_kaiming_uniform(k_w2, output_size, hidden_size)

    # --- Small-batch (inference) path: single VMEM block, no grid. ---
    x = jax.random.normal(k_x, (batch, input_size), dtype=jnp.float32)
    out = linear_qnet_forward(x, w1, b1, w2, b2)
    out = jax.block_until_ready(out)
    ref = _reference(x, w1, b1, w2, b2)
    assert out.shape == (batch, output_size)
    assert jnp.allclose(out, ref, atol=1e-5, rtol=1e-5)

    # --- Large-batch (training) path: batch tiled, weights VMEM-resident. ---
    big_batch = 2048
    xb = jax.random.normal(k_big, (big_batch, input_size), dtype=jnp.float32)
    out_b = linear_qnet_forward(xb, w1, b1, w2, b2)
    out_b = jax.block_until_ready(out_b)
    ref_b = _reference(xb, w1, b1, w2, b2)
    assert out_b.shape == (big_batch, output_size)
    assert jnp.allclose(out_b, ref_b, atol=1e-5, rtol=1e-5)

    # TODO(synk): save()/load() (torch.save of the state dict) is host-side
    # file I/O with no Pallas equivalent; parameters here are plain JAX arrays.
    print("KERNEL_OK")
</pallas_src>

<mosaic_0001>
module attributes {stable_mosaic.version = 11 : i64} {
  func.func @_qnet_kernel(%arg0: memref<8x11xf32, #tpu.memory_space<vmem>>, %arg1: memref<32x11xf32, #tpu.memory_space<vmem>>, %arg2: memref<1x32xf32, #tpu.memory_space<vmem>>, %arg3: memref<3x32xf32, #tpu.memory_space<vmem>>, %arg4: memref<1x3xf32, #tpu.memory_space<vmem>>, %arg5: memref<8x3xf32, #tpu.memory_space<vmem>>) attributes {dimension_semantics = [], scalar_prefetch = 0 : i64, scratch_operands = 0 : i64, tpu.core_type = #tpu.core_type<tc>} {
    %c0 = arith.constant 0 : index
    %c0_0 = arith.constant 0 : index
    %0 = vector.load %arg0[%c0, %c0_0] : memref<8x11xf32, #tpu.memory_space<vmem>>, vector<8x11xf32>
    %c0_1 = arith.constant 0 : index
    %c0_2 = arith.constant 0 : index
    %1 = vector.load %arg1[%c0_1, %c0_2] : memref<32x11xf32, #tpu.memory_space<vmem>>, vector<32x11xf32>
    %cst = arith.constant dense<0.000000e+00> : vector<8x32xf32>
    %2 = tpu.matmul %0, %1, %cst {dimension_numbers = #tpu.dot_dimension_numbers<[1], [1], [0], [0], [0, 0, 1, 0], [], []>} : vector<8x11xf32>, vector<32x11xf32>, vector<8x32xf32> -> vector<8x32xf32>
    %c0_3 = arith.constant 0 : index
    %c0_4 = arith.constant 0 : index
    %3 = vector.load %arg2[%c0_3, %c0_4] : memref<1x32xf32, #tpu.memory_space<vmem>>, vector<1x32xf32>
    %4 = vector.broadcast %3 : vector<1x32xf32> to vector<8x32xf32>
    %5 = arith.addf %2, %4 : vector<8x32xf32>
    %cst_5 = arith.constant 0.000000e+00 : f32
    %6 = vector.broadcast %cst_5 : f32 to vector<8x32xf32>
    %7 = arith.maximumf %5, %6 : vector<8x32xf32>
    %c0_6 = arith.constant 0 : index
    %c0_7 = arith.constant 0 : index
    %8 = vector.load %arg3[%c0_6, %c0_7] : memref<3x32xf32, #tpu.memory_space<vmem>>, vector<3x32xf32>
    %cst_8 = arith.constant dense<0.000000e+00> : vector<8x3xf32>
    %9 = tpu.matmul %7, %8, %cst_8 {dimension_numbers = #tpu.dot_dimension_numbers<[1], [1], [0], [0], [0, 0, 1, 0], [], []>} : vector<8x32xf32>, vector<3x32xf32>, vector<8x3xf32> -> vector<8x3xf32>
    %c0_9 = arith.constant 0 : index
    %c0_10 = arith.constant 0 : index
    %10 = vector.load %arg4[%c0_9, %c0_10] : memref<1x3xf32, #tpu.memory_space<vmem>>, vector<1x3xf32>
    %11 = vector.broadcast %10 : vector<1x3xf32> to vector<8x3xf32>
    %12 = arith.addf %9, %11 : vector<8x3xf32>
    %c0_11 = arith.constant 0 : index
    %c0_12 = arith.constant 0 : index
    %13 = vector.load %arg5[%c0_11, %c0_12] : memref<8x3xf32, #tpu.memory_space<vmem>>, vector<8x3xf32>
    tpu.vector_store %arg5[%c0_11, %c0_12], %12 {strides = array<i32>} : memref<8x3xf32, #tpu.memory_space<vmem>>, vector<8x3xf32>,
    return
  }
}

</mosaic_0001>

<llo_original>
// kernel: linear_qnet_forward.1
$region0: #{linear_qnet_forward.1}
  #allocation0 [shape = 'u32[]', space=smem, size = 0x4, offset = 0x4, fixed_abs, tag = 'smem constant byte address 0x4 - core index']
  #allocation1 [shape = 'u32[144,128]{1,0:T(1,128)}', space=vmem, size = 0x12000, scoped, tag = 'internal scratch']
  %s0 = inlined_call_operand.vmem [shape: f32[8,11], index: 0, kind: input, shape index: {}]
  %s1 = inlined_call_operand.vmem [shape: f32[32,11], index: 1, kind: input, shape index: {}]
  %s2 = inlined_call_operand.vmem [shape: f32[1,32], index: 2, kind: input, shape index: {}]
  %s3 = inlined_call_operand.vmem [shape: f32[3,32], index: 3, kind: input, shape index: {}]
  %s4 = inlined_call_operand.vmem [shape: f32[1,3], index: 4, kind: input, shape index: {}]
  %s5 = inlined_call_operand.vmem [shape: f32[8,3], index: 5, kind: output, shape index: {}]
  %s6 = sld [smem:[#allocation0]]
  $region30: #{linear_qnet_forward.1} parent=0
    _
  %s8 = ssub.s32 1, %s6
  %s9 = scalar_select 0, %s8, %s6
  // Predicated region
  $region2: #{linear_qnet_forward.1} parent=0 // pred_check
    _
  $region3: #{linear_qnet_forward.1} parent=0 // pred_check_branch
    %11 = sbr.rel (0) target = $region5
  $region4: #{linear_qnet_forward.1} parent=0 // pred_region
    _
  $region5: #{linear_qnet_forward.1} parent=0 // pred_fallthru
    _
  // Predicated region
  $region6: #{linear_qnet_forward.1} parent=0 // pred_check
    _
  $region7: #{linear_qnet_forward.1} parent=0 // pred_check_branch
    %13 = sbr.rel (0) target = $region9
  $region8: #{linear_qnet_forward.1} parent=0 // pred_region
    _
  $region9: #{linear_qnet_forward.1} parent=0 // pred_fallthru
    _
  // Predicated region
  $region10: #{linear_qnet_forward.1} parent=0 // pred_check
    _
  $region11: #{linear_qnet_forward.1} parent=0 // pred_check_branch
    %15 = sbr.rel (0) target = $region13
  $region12: #{linear_qnet_forward.1} parent=0 // pred_region
    _
  $region13: #{linear_qnet_forward.1} parent=0 // pred_fallthru
    _
  // Predicated region
  $region14: #{linear_qnet_forward.1} parent=0 // pred_check
    _
  $region15: #{linear_qnet_forward.1} parent=0 // pred_check_branch
    %17 = sbr.rel (0) target = $region17
  $region16: #{linear_qnet_forward.1} parent=0 // pred_region
    _
  $region17: #{linear_qnet_forward.1} parent=0 // pred_fallthru
    _
  // Predicated region
  $region18: #{linear_qnet_forward.1} parent=0 // pred_check
    _
  $region19: #{linear_qnet_forward.1} parent=0 // pred_check_branch
    %19 = sbr.rel (0) target = $region21
  $region20: #{linear_qnet_forward.1} parent=0 // pred_region
    _
  $region21: #{linear_qnet_forward.1} parent=0 // pred_fallthru
    _
  %v20 = vld [vmem:[%s0] sm:$0xff]
  %v21 = vld [vmem:[%s1] sm:$0xff]
  %v22 = vld [vmem:[%s1 + $0x8] sm:$0xff]
  %v23 = vld [vmem:[%s1 + $0x10] sm:$0xff]
  %v24 = vld [vmem:[%s1 + $0x18] sm:$0xff]
  %v25 = vld [vmem:[%s2] sm:$0x1]
  %v27 = vlaneseq
  %v28 = vshrl.u32 %v27, 7
  %v29 = vsub.s32 0, %v28
  %v30 = vrot.slane %v25, %v29
  %vm32 = vcmask 89088
  %v34 = vsel %vm32, %v20, 0
  %v37 = vsel %vm32, %v21, 0
  %v40 = vsel %vm32, %v22, 0
  %v43 = vsel %vm32, %v23, 0
  %v46 = vsel %vm32, %v24, 0
  %48 = vmatprep.subr.mxu0 0.0
  %49 = vmatpush1.xpose.msra.mxu0 0.0
  %50 = vmatprep.subr.mxu0 0.0
  %51 = vmatpush1.xpose.msra.mxu0 0.0
  %52 = vmatprep.subr.mxu0 0.0
  %53 = vmatpush1.xpose.msra.mxu0 0.0
  %54 = vmatprep.subr.mxu0 0.0
  %55 = vmatpush1.xpose.msra.mxu0 0.0
  %56 = vmatprep.subr.mxu0 0.0
  %57 = vmatpush1.xpose.msra.mxu0 0.0
  %58 = vmatprep.subr.mxu0 0.0
  %59 = vmatpush1.xpose.msra.mxu0 0.0
  %60 = vmatprep.subr.mxu0 0.0
  %61 = vmatpush1.xpose.msra.mxu0 0.0
  %62 = vmatprep.subr.mxu0 0.0
  %63 = vmatpush1.xpose.msra.mxu0 0.0
  %64 = vmatprep.subr.mxu0 0.0
  %65 = vmatpush1.xpose.msra.mxu0 0.0
  %66 = vmatprep.subr.mxu0 0.0
  %67 = vmatpush1.xpose.msra.mxu0 0.0
  %68 = vmatprep.subr.mxu0 0.0
  %69 = vmatpush1.xpose.msra.mxu0 0.0
  %70 = vmatprep.subr.mxu0 0.0
  %71 = vmatpush1.xpose.msra.mxu0 0.0
  %72 = vmatprep.subr.mxu0 0.0
  %73 = vmatpush1.xpose.msra.mxu0 %v46
  %74 = vmatprep.subr.mxu0 0.0
  %75 = vmatpush1.xpose.msra.mxu0 %v43
  %76 = vmatprep.subr.mxu0 0.0
  %77 = vmatpush1.xpose.msra.mxu0 %v40
  %78 = vmatprep.subr.mxu0 0.0
  %79 = vmatpush1.xpose.msra.mxu0 %v37
  %80 = vmatprep.subr.mxu0 0.0
  %81 = vmatpush2.xpose.msra.mxu0 0.0
  %82 = vmatprep.subr.mxu0 0.0
  %83 = vmatpush2.xpose.msra.mxu0 0.0
  %84 = vmatprep.subr.mxu0 0.0
  %85 = vmatpush2.xpose.msra.mxu0 0.0
  %86 = vmatprep.subr.mxu0 0.0
  %87 = vmatpush2.xpose.msra.mxu0 0.0
  %88 = vmatprep.subr.mxu0 0.0
  %89 = vmatpush2.xpose.msra.mxu0 0.0
  %90 = vmatprep.subr.mxu0 0.0
  %91 = vmatpush2.xpose.msra.mxu0 0.0
  %92 = vmatprep.subr.mxu0 0.0
  %93 = vmatpush2.xpose.msra.mxu0 0.0
  %94 = vmatprep.subr.mxu0 0.0
  %95 = vmatpush2.xpose.msra.mxu0 0.0
  %96 = vmatprep.subr.mxu0 0.0
  %97 = vmatpush2.xpose.msra.mxu0 0.0
  %98 = vmatprep.subr.mxu0 0.0
  %99 = vmatpush2.xpose.msra.mxu0 0.0
  %100 = vmatprep.subr.mxu0 0.0
  %101 = vmatpush2.xpose.msra.mxu0 0.0
  %102 = vmatprep.subr.mxu0 0.0
  %103 = vmatpush2.xpose.msra.mxu0 0.0
  %104 = vmatprep.subr.mxu0 0.0
  %105 = vmatpush2.xpose.msra.mxu0 0.0
  %106 = vmatprep.subr.mxu0 0.0
  %107 = vmatpush2.xpose.msra.mxu0 0.0
  %108 = vmatprep.subr.mxu0 0.0
  %109 = vmatpush2.xpose.msra.mxu0 0.0
  %110 = vmatprep.subr.mxu0 0.0
  %111 = vmatpush2.xpose.msra.mxu0 0.0
  %112 = vmatprep.mubr.f32.mxu0 0.0
  %113 = vmatmul.mubr.f32.gmra.mxu0 %v34
  %v114 = vpop.f32.mrf.mxu0
  %v115 = vadd.f32 %v30, %v114
  %v116 = vpop.f32.mrf.mxu0
  %117 = vdwg.mxu0
  %v118 = vmax.f32 %v115, 0.0
  %v119 = vld [vmem:[%s3] sm:$0x7]
  %v120 = vld [vmem:[%s4] sm:$0x1]
  %v122 = vlaneseq
  %v123 = vshrl.u32 %v122, 7
  %v124 = vsub.s32 0, %v123
  %v125 = vrot.slane %v120, %v124
  %vm127 = vcmask 261120
  %v129 = vsel %vm127, %v118, 0
  %v132 = vsel %vm127, %v119, 0
  %134 = vmatprep.subr.mxu0 0.0
  %135 = vmatpush1.xpose.msra.mxu0 0.0
  %136 = vmatprep.subr.mxu0 0.0
  %137 = vmatpush1.xpose.msra.mxu0 0.0
  %138 = vmatprep.subr.mxu0 0.0
  %139 = vmatpush1.xpose.msra.mxu0 0.0
  %140 = vmatprep.subr.mxu0 0.0
  %141 = vmatpush1.xpose.msra.mxu0 0.0
  %142 = vmatprep.subr.mxu0 0.0
  %143 = vmatpush1.xpose.msra.mxu0 0.0
  %144 = vmatprep.subr.mxu0 0.0
  %145 = vmatpush1.xpose.msra.mxu0 0.0
  %146 = vmatprep.subr.mxu0 0.0
  %147 = vmatpush1.xpose.msra.mxu0 0.0
  %148 = vmatprep.subr.mxu0 0.0
  %149 = vmatpush1.xpose.msra.mxu0 0.0
  %150 = vmatprep.subr.mxu0 0.0
  %151 = vmatpush1.xpose.msra.mxu0 0.0
  %152 = vmatprep.subr.mxu0 0.0
  %153 = vmatpush1.xpose.msra.mxu0 0.0
  %154 = vmatprep.subr.mxu0 0.0
  %155 = vmatpush1.xpose.msra.mxu0 0.0
  %156 = vmatprep.subr.mxu0 0.0
  %157 = vmatpush1.xpose.msra.mxu0 0.0
  %158 = vmatprep.subr.mxu0 0.0
  %159 = vmatpush1.xpose.msra.mxu0 0.0
  %160 = vmatprep.subr.mxu0 0.0
  %161 = vmatpush1.xpose.msra.mxu0 0.0
  %162 = vmatprep.subr.mxu0 0.0
  %163 = vmatpush1.xpose.msra.mxu0 0.0
  %164 = vmatprep.subr.mxu0 0.0
  %165 = vmatpush1.xpose.msra.mxu0 %v132
  %166 = vmatprep.subr.mxu0 0.0
  %167 = vmatpush2.xpose.msra.mxu0 0.0
  %168 = vmatprep.subr.mxu0 0.0
  %169 = vmatpush2.xpose.msra.mxu0 0.0
  %170 = vmatprep.subr.mxu0 0.0
  %171 = vmatpush2.xpose.msra.mxu0 0.0
  %172 = vmatprep.subr.mxu0 0.0
  %173 = vmatpush2.xpose.msra.mxu0 0.0
  %174 = vmatprep.subr.mxu0 0.0
  %175 = vmatpush2.xpose.msra.mxu0 0.0
  %176 = vmatprep.subr.mxu0 0.0
  %177 = vmatpush2.xpose.msra.mxu0 0.0
  %178 = vmatprep.subr.mxu0 0.0
  %179 = vmatpush2.xpose.msra.mxu0 0.0
  %180 = vmatprep.subr.mxu0 0.0
  %181 = vmatpush2.xpose.msra.mxu0 0.0
  %182 = vmatprep.subr.mxu0 0.0
  %183 = vmatpush2.xpose.msra.mxu0 0.0
  %184 = vmatprep.subr.mxu0 0.0
  %185 = vmatpush2.xpose.msra.mxu0 0.0
  %186 = vmatprep.subr.mxu0 0.0
  %187 = vmatpush2.xpose.msra.mxu0 0.0
  %188 = vmatprep.subr.mxu0 0.0
  %189 = vmatpush2.xpose.msra.mxu0 0.0
  %190 = vmatprep.subr.mxu0 0.0
  %191 = vmatpush2.xpose.msra.mxu0 0.0
  %192 = vmatprep.subr.mxu0 0.0
  %193 = vmatpush2.xpose.msra.mxu0 0.0
  %194 = vmatprep.subr.mxu0 0.0
  %195 = vmatpush2.xpose.msra.mxu0 0.0
  %196 = vmatprep.subr.mxu0 0.0
  %197 = vmatpush2.xpose.msra.mxu0 0.0
  %198 = vmatprep.mubr.f32.mxu0 0.0
  %199 = vmatmul.mubr.f32.gmra.mxu0 %v129
  %v200 = vpop.f32.mrf.mxu0
  %v201 = vadd.f32 %v125, %v200
  %v202 = vpop.f32.mrf.mxu0
  %203 = vdwg.mxu0
  %vm204 = vcmask 23552
  %205 = vst.msk [vmem:[%s5] sm:$0xff] %vm204, %v201
  // Predicated region
  $region22: #{linear_qnet_forward.1} parent=0 // pred_check
    _
  $region23: #{linear_qnet_forward.1} parent=0 // pred_check_branch
    %207 = sbr.rel (0) target = $region25
  $region24: #{linear_qnet_forward.1} parent=0 // pred_region
    _
  $region25: #{linear_qnet_forward.1} parent=0 // pred_fallthru
    _
  // Predicated region
  $region26: #{linear_qnet_forward.1} parent=0 // pred_check
    _
  $region27: #{linear_qnet_forward.1} parent=0 // pred_check_branch
    %209 = sbr.rel (0) target = $region29
  $region28: #{linear_qnet_forward.1} parent=0 // pred_region
    _
  $region29: #{linear_qnet_forward.1} parent=0 // pred_fallthru
    _

</llo_original>
